<compile_context>
chip_gen: v6e
topology: v6e:2x2x1
jax: 0.10.0
libtpu: 0.0.40
codegen_flags: <defaults>
</compile_context>

<pallas_src>
import math

import jax
import jax.numpy as jnp
from jax.experimental import pallas as pl
from jax.experimental.pallas import tpu as pltpu


def attention_kernel(x_ref, w_ref, b_ref, o_ref):
    # x_ref: (TB, S, F)   w_ref: (1, F)   b_ref: (1, S)   o_ref: (TB, F)
    x = x_ref[...].astype(jnp.float32)
    w = w_ref[...].astype(jnp.float32)      # (1, F)
    b = b_ref[...].astype(jnp.float32)      # (1, S)

    # eij = <x, w> over the feature axis: VPU multiply + lane reduce
    # (avoids a 1-output-lane MXU matvec and the (B,S,1)->(B,S) relayout).
    eij = jnp.sum(x * w[None, :, :], axis=-1)            # (TB, S)
    eij = jnp.tanh(eij + b)                               # bias broadcast over batch
    a = jnp.exp(eij)
    # NOTE: matches PyTorch exactly — the 1e-10 is added AFTER the divide.
    a = a / jnp.sum(a, axis=1, keepdims=True) + 1e-10

    # Weighted sum over the step axis; kept as a single fused expression so the
    # compiler doesn't have to hold a separate (TB,S,F) temporary around.
    o_ref[...] = jnp.sum(x * a[..., None], axis=1).astype(o_ref.dtype)


def _choose_batch_tile(B, S, F, bytes_per_elem=4, target_bytes=4 << 20):
    """Pick a batch tile: ~4 MiB per x tile (x2 double-buffering comfortably fits
    the default scoped VMEM limit on v5e/v6e/v7x), rounded to a multiple of 8
    so the (TB, F) output block satisfies the (8,128) rule when TB < B."""
    row_bytes = S * F * bytes_per_elem
    tb = max(1, target_bytes // row_bytes)
    if tb >= B:
        return B
    tb = max(8, (tb // 8) * 8)
    if tb >= B:
        return B
    return tb


def attention_forward(x, weight, bias_vec):
    """x: (B, S, F) f32; weight: (F, 1) f32; bias_vec: (S,) f32 -> (B, F) f32."""
    B, S, F = x.shape
    w_row = weight.reshape(1, F)     # lane-dense row vector for the VPU reduce
    b_row = bias_vec.reshape(1, S)   # 2-D for TPU-friendly layout

    TB = _choose_batch_tile(B, S, F)
    grid = (pl.cdiv(B, TB),)

    cost = pl.CostEstimate(
        flops=4 * B * S * F,                 # eij mul+add  +  weighted-sum mul+add
        transcendentals=2 * B * S,           # tanh + exp per (batch, step)
        bytes_accessed=4 * (B * S * F + B * F + F + S),
    )

    return pl.pallas_call(
        attention_kernel,
        out_shape=jax.ShapeDtypeStruct((B, F), x.dtype),
        grid=grid,
        in_specs=[
            pl.BlockSpec((TB, S, F), lambda i: (i, 0, 0)),
            pl.BlockSpec((1, F), lambda i: (0, 0)),   # constant -> DMA elided across steps
            pl.BlockSpec((1, S), lambda i: (0, 0)),   # constant -> DMA elided across steps
        ],
        out_specs=pl.BlockSpec((TB, F), lambda i: (i, 0)),
        compiler_params=pltpu.CompilerParams(
            dimension_semantics=("parallel",)),       # megacore sharding on v7x
        cost_estimate=cost,
    )(x, w_row, b_row)


def init_params(key, feature_dim, step_dim, bias=True):
    # xavier_uniform_ on (feature_dim, 1): bound = sqrt(6 / (fan_in + fan_out))
    bound = math.sqrt(6.0 / (feature_dim + 1))
    weight = jax.random.uniform(
        key, (feature_dim, 1), dtype=jnp.float32, minval=-bound, maxval=bound)
    b = jnp.zeros((step_dim,), dtype=jnp.float32) if bias else None
    return weight, b


def reference_forward(x, weight, bias_vec):
    B, S, F = x.shape
    eij = (x.reshape(-1, F) @ weight).reshape(B, S)
    eij = eij + bias_vec
    eij = jnp.tanh(eij)
    a = jnp.exp(eij)
    a = a / jnp.sum(a, axis=1, keepdims=True) + 1e-10
    return jnp.sum(x * a[..., None], axis=1)


if __name__ == "__main__":
    # Small shapes consistent with the module: batch=2, step_dim=8, feature_dim=32
    B, step_dim, feature_dim = 2, 8, 32

    key = jax.random.PRNGKey(0)
    k_x, k_w = jax.random.split(key)

    x = jax.random.normal(k_x, (B, step_dim, feature_dim), dtype=jnp.float32)
    weight, bias_vec = init_params(k_w, feature_dim, step_dim, bias=True)

    out = attention_forward(x, weight, bias_vec)
    out = jax.block_until_ready(out)

    ref = reference_forward(x, weight, bias_vec)
    assert out.shape == (B, feature_dim)
    assert jnp.allclose(out, ref, atol=1e-5, rtol=1e-5)

    print("KERNEL_OK")
</pallas_src>

<mosaic_0001>
module attributes {stable_mosaic.version = 11 : i64} {
  func.func @attention_kernel(%arg0: i32, %arg1: memref<2x8x32xf32, #tpu.memory_space<vmem>>, %arg2: memref<1x32xf32, #tpu.memory_space<vmem>>, %arg3: memref<1x8xf32, #tpu.memory_space<vmem>>, %arg4: memref<2x32xf32, #tpu.memory_space<vmem>>) attributes {dimension_semantics = [#tpu.dimension_semantics<parallel>], iteration_bounds = array<i64: 1>, scalar_prefetch = 0 : i64, scratch_operands = 0 : i64, tpu.core_type = #tpu.core_type<tc>, window_params = [{transform_indices = @transform_0, window_bounds = array<i64: 2, 8, 32>}, {pipeline_mode = #tpu.pipeline_mode<synchronous>, transform_indices = @transform_1, window_bounds = array<i64: 1, 32>}, {pipeline_mode = #tpu.pipeline_mode<synchronous>, transform_indices = @transform_2, window_bounds = array<i64: 1, 8>}, {transform_indices = @transform_3, window_bounds = array<i64: 2, 32>}]} {
    %c0 = arith.constant 0 : index
    %c0_0 = arith.constant 0 : index
    %c0_1 = arith.constant 0 : index
    %0 = vector.load %arg1[%c0, %c0_0, %c0_1] : memref<2x8x32xf32, #tpu.memory_space<vmem>>, vector<2x8x32xf32>
    %c0_2 = arith.constant 0 : index
    %c0_3 = arith.constant 0 : index
    %1 = vector.load %arg2[%c0_2, %c0_3] : memref<1x32xf32, #tpu.memory_space<vmem>>, vector<1x32xf32>
    %c0_4 = arith.constant 0 : index
    %c0_5 = arith.constant 0 : index
    %2 = vector.load %arg3[%c0_4, %c0_5] : memref<1x8xf32, #tpu.memory_space<vmem>>, vector<1x8xf32>
    %3 = vector.shape_cast %1 : vector<1x32xf32> to vector<1x1x32xf32>
    %4 = vector.broadcast %3 : vector<1x1x32xf32> to vector<2x8x32xf32>
    %5 = arith.mulf %0, %4 : vector<2x8x32xf32>
    %cst = arith.constant dense<0.000000e+00> : vector<2x8xf32>
    %6 = vector.multi_reduction <add>, %5, %cst [2] : vector<2x8x32xf32> to vector<2x8xf32>
    %7 = vector.broadcast %2 : vector<1x8xf32> to vector<2x8xf32>
    %8 = arith.addf %6, %7 : vector<2x8xf32>
    %9 = math.tanh %8 : vector<2x8xf32>
    %10 = math.exp %9 : vector<2x8xf32>
    %cst_6 = arith.constant dense<0.000000e+00> : vector<2xf32>
    %11 = vector.multi_reduction <add>, %10, %cst_6 [1] : vector<2x8xf32> to vector<2xf32>
    %12 = vector.shape_cast %11 : vector<2xf32> to vector<2x1xf32>
    %13 = vector.broadcast %12 : vector<2x1xf32> to vector<2x8xf32>
    %14 = arith.divf %10, %13 : vector<2x8xf32>
    %cst_7 = arith.constant 1.000000e-10 : f32
    %15 = vector.broadcast %cst_7 : f32 to vector<2x8xf32>
    %16 = arith.addf %14, %15 : vector<2x8xf32>
    %17 = vector.shape_cast %16 : vector<2x8xf32> to vector<2x8x1xf32>
    %18 = vector.broadcast %17 : vector<2x8x1xf32> to vector<2x8x32xf32>
    %19 = arith.mulf %0, %18 : vector<2x8x32xf32>
    %cst_8 = arith.constant dense<0.000000e+00> : vector<2x32xf32>
    %20 = vector.multi_reduction <add>, %19, %cst_8 [1] : vector<2x8x32xf32> to vector<2x32xf32>
    %c0_9 = arith.constant 0 : index
    %c0_10 = arith.constant 0 : index
    %21 = vector.load %arg4[%c0_9, %c0_10] : memref<2x32xf32, #tpu.memory_space<vmem>>, vector<2x32xf32>
    tpu.vector_store %arg4[%c0_9, %c0_10], %20 {strides = array<i32>} : memref<2x32xf32, #tpu.memory_space<vmem>>, vector<2x32xf32>,
    return
  }
  func.func @transform_0(%arg0: i32) -> (i32, i32, i32) {
    %c0_i32 = arith.constant 0 : i32
    %c0_i32_0 = arith.constant 0 : i32
    %c0_i32_1 = arith.constant 0 : i32
    return %arg0, %c0_i32, %c0_i32_0 : i32, i32, i32
  }
  func.func @transform_1(%arg0: i32) -> (i32, i32) {
    %c0_i32 = arith.constant 0 : i32
    %c0_i32_0 = arith.constant 0 : i32
    %c0_i32_1 = arith.constant 0 : i32
    return %c0_i32, %c0_i32_0 : i32, i32
  }
  func.func @transform_2(%arg0: i32) -> (i32, i32) {
    %c0_i32 = arith.constant 0 : i32
    %c0_i32_0 = arith.constant 0 : i32
    %c0_i32_1 = arith.constant 0 : i32
    return %c0_i32, %c0_i32_0 : i32, i32
  }
  func.func @transform_3(%arg0: i32) -> (i32, i32) {
    %c0_i32 = arith.constant 0 : i32
    %c0_i32_0 = arith.constant 0 : i32
    return %arg0, %c0_i32 : i32, i32
  }
}

</mosaic_0001>

<llo_original>
// kernel: tpu_custom_call.1
$region0: #{tpu_custom_call.1}
  #allocation0 [shape = 'u32[]', space=smem, size = 0x4, offset = 0x4, fixed_abs, tag = 'smem constant byte address 0x4 - core index']
  #allocation1 [shape = 'u32[144,128]{1,0:T(1,128)}', space=vmem, size = 0x12000, scoped, tag = 'internal scratch']
  %s0 = inlined_call_operand.hbm [shape: f32[2,8,32], index: 0, kind: input, shape index: {}]
  %s1 = inlined_call_operand.vmem [shape: f32[1,32], index: 1, kind: input, shape index: {}]
  %s2 = inlined_call_operand.vmem [shape: f32[1,8], index: 2, kind: input, shape index: {}]
  %s3 = inlined_call_operand.hbm [shape: f32[2,32], index: 3, kind: output, shape index: {}]
  %s4 = sld [smem:[#allocation0]]
  $region26: #{tpu_custom_call.1} parent=0
    _
  %s6 = ssub.s32 1, %s4
  %s7 = scalar_select 0, %s6, %s4
  $region1: #{tpu_custom_call.1} parent=0
    #allocation2 [shape = 'u8[8192]{0}', space=vmem, size = 0x2000, scoped, tag = 'input window, operand 0, single buffered']
    #allocation3 [shape = 's32[1]{0}', space=sflag, size = 0x4, scoped, tag = 'scoped memory for tpu_custom_call.1']
    #allocation4 [shape = 's32[1]{0}', space=sflag, size = 0x4, scoped, tag = 'scoped memory for tpu_custom_call.1']
    #allocation5 [shape = 'u8[1024]{0}', space=vmem, size = 0x400, scoped, tag = 'output window, operand 0, single buffered']
    %8 = vsyncpa [#allocation3], 0
    %9 = vsyncpa [#allocation4], 0
    // Predicated region
    $region2: #{tpu_custom_call.1} parent=1 // pred_check
      _
    $region3: #{tpu_custom_call.1} parent=1 // pred_check_branch
      %11 = sbr.rel (0) target = $region5
    $region4: #{tpu_custom_call.1} parent=1 // pred_region
      %s13 = ssub.s32 256, 256
      %14 = vsyncadd [#allocation3], %s13
      %s15 = sshll.u32 [#allocation2], 4
      %s16 = int_to_ptr.vmem [resolvable:$true] %s15
      %21 = dma.hbm_to_vmem [thread:$0]  %s0, 256, %s16, [#allocation3], 128, 128, 8
    $region5: #{tpu_custom_call.1} parent=1 // pred_fallthru
      _
    // Predicated region
    $region6: #{tpu_custom_call.1} parent=1 // pred_check
      _
    $region7: #{tpu_custom_call.1} parent=1 // pred_check_branch
      %23 = sbr.rel (0) target = $region9
    $region8: #{tpu_custom_call.1} parent=1 // pred_region
      _
    $region9: #{tpu_custom_call.1} parent=1 // pred_fallthru
      _
    // Predicated region
    $region10: #{tpu_custom_call.1} parent=1 // pred_check
      _
    $region11: #{tpu_custom_call.1} parent=1 // pred_check_branch
      %25 = sbr.rel (0) target = $region13
    $region12: #{tpu_custom_call.1} parent=1 // pred_region
      _
    $region13: #{tpu_custom_call.1} parent=1 // pred_fallthru
      _
    // Predicated region
    $region14: #{tpu_custom_call.1} parent=1 // pred_check
      _
    $region15: #{tpu_custom_call.1} parent=1 // pred_check_branch
      %27 = sbr.rel (0) target = $region17
    $region16: #{tpu_custom_call.1} parent=1 // pred_region
      %28 = dma.done [#allocation3], 256
    $region17: #{tpu_custom_call.1} parent=1 // pred_fallthru
      _
    %v29 = vld [vmem:[#allocation2] sm:$0xff]
    %v30 = vld [vmem:[#allocation2 + $0x8] sm:$0xff]
    %v31 = vld [vmem:[%s1] sm:$0x1]
    %v32 = vld [vmem:[%s2] sm:$0x1]
    %v34 = vlaneseq
    %v35 = vshrl.u32 %v34, 7
    %v36 = vsub.s32 0, %v35
    %v37 = vrot.slane %v31, %v36
    %v39 = vmul.f32 %v29, %v37
    %v40 = vmul.f32 %v30, %v37
    %vm41 = vcmask 261120
    %v42 = vsel %vm41, %v39, 0.0
    %43 = vadd.xlane.f32.xlu0 %v42
    %v44 = vpop.xlane.xlu0 %43
    %v45 = vsel %vm41, %v40, 0.0
    %46 = vadd.xlane.f32.xlu0 %v45
    %v47 = vpop.xlane.xlu0 %46
    %v49 = vlaneseq
    %v50 = vshrl.u32 %v49, 7
    %v51 = vsub.s32 0, %v50
    %v52 = vrot.slane %v32, %v51
    %54 = vbcast.lane.b32.xlu0 %v52, 256
    %v55 = vpop.permute.xlu0 %54
    %v57 = vadd.f32 %v44, %v55
    %v58 = vadd.f32 %v47, %v55
    %v59 = vtanh.pop %v57
    %v60 = vtanh.pop %v58
    %v61 = vmul.f32 %v59, 1.442695
    %v62 = vpow.pop %v61
    %v63 = vmul.f32 %v60, 1.442695
    %v64 = vpow.pop %v63
    %67 = vset.pattern.permute.xlu0 0
    %68 = vperm.xlu0 %67, %v62
    %v69 = vpop.permute.xlu0 %68
    %70 = vset.pattern.permute.xlu0 0
    %71 = vperm.xlu0 %70, %v64
    %v72 = vpop.permute.xlu0 %71
    %v73 = vlaneseq
    %v74 = vand.u32 %v73, 127
    %v75 = vlaneseq
    %v76 = vshrl.u32 %v75, 7
    %v77 = vsub.s32 %v74, %v76
    %v78 = vrot.slane %v69, %v77
    %v79 = vlaneseq
    %v80 = vshrl.u32 %v79, 7
    %v81 = vsub.s32 %v74, %v80
    %v82 = vrot.slane %v72, %v81
    %vm83 = vcmask 1041409
    %v84 = vsel %vm83, %v82, %v78
    %vm86 = vcmask 58368
    %v87 = vsel %vm86, %v84, 0.0
    %88 = vadd.xlane.f32.xlu0 %v87
    %v89 = vpop.xlane.xlu0 %88
    %v91 = vlaneseq
    %v92 = vshrl.u32 %v91, 7
    %v93 = vsub.s32 0, %v92
    %v94 = vrot.slane %v89, %v93
    %v95 = vlaneseq
    %v96 = vshrl.u32 %v95, 7
    %v97 = vsub.s32 1, %v96
    %v98 = vrot.slane %v89, %v97
    %v101 = vrcp.pop %v94
    %v102 = vmul.f32 %v62, %v101
    %v103 = vrcp.pop %v98
    %v104 = vmul.f32 %v64, %v103
    %v105 = vadd.f32 %v102, 1e-10
    %v106 = vadd.f32 %v104, 1e-10
    %108 = vset.pattern.permute.xlu0 0
    %109 = vperm.xlu0 %108, %v105
    %v110 = vpop.permute.xlu0 %109
    %113 = vset.pattern.permute.xlu0 0
    %114 = vperm.xlu0 %113, %v106
    %v115 = vpop.permute.xlu0 %114
    %v117 = vmul.f32 %v29, %v110
    %v118 = vmul.f32 %v30, %v115
    %v119 = vsel %vm41, %v117, 0.0
    %v120 = vrot.slane %v119, 4
    %v121 = vadd.f32 %v119, %v120
    %v122 = vrot.slane %v121, 2
    %v123 = vadd.f32 %v121, %v122
    %v124 = vrot.slane %v123, 1
    %v125 = vadd.f32 %v123, %v124
    %v126 = vsel %vm41, %v118, 0.0
    %v127 = vrot.slane %v126, 4
    %v128 = vadd.f32 %v126, %v127
    %v129 = vrot.slane %v128, 2
    %v130 = vadd.f32 %v128, %v129
    %v131 = vrot.slane %v130, 1
    %v132 = vadd.f32 %v130, %v131
    %v135 = vsel %vm83, %v132, %v125
    %vm137 = vcmask 254976
    %138 = vst.msk [vmem:[#allocation5] sm:$0x3] %vm137, %v135
    // Predicated region
    $region18: #{tpu_custom_call.1} parent=1 // pred_check
      _
    $region19: #{tpu_custom_call.1} parent=1 // pred_check_branch
      %140 = sbr.rel (0) target = $region21
    $region20: #{tpu_custom_call.1} parent=1 // pred_region
      %s142 = ssub.s32 32, 32
      %143 = vsyncadd [#allocation4], %s142
      %s145 = sshll.u32 [#allocation5], 4
      %s146 = int_to_ptr.vmem [resolvable:$true] %s145
      %148 = dma.vmem_to_hbm [thread:$0]  %s146, 32, %s3, [#allocation4]
    $region21: #{tpu_custom_call.1} parent=1 // pred_fallthru
      _
    // Predicated region
    $region22: #{tpu_custom_call.1} parent=1 // pred_check
      _
    $region23: #{tpu_custom_call.1} parent=1 // pred_check_branch
      %150 = sbr.rel (0) target = $region25
    $region24: #{tpu_custom_call.1} parent=1 // pred_region
      %151 = dma.done [#allocation4], 32
    $region25: #{tpu_custom_call.1} parent=1 // pred_fallthru
      _
    %152 = vsyncpa [#allocation3], 1
    %153 = vsyncpa [#allocation4], 1

</llo_original>
